<compile_context>
chip_gen: v5e
topology: v5e:2x2
jax: 0.10.0
libtpu: 0.0.40
codegen_flags: <defaults>
</compile_context>

<pallas_src>
import functools

import jax
import jax.numpy as jnp
from jax.experimental import pallas as pl
from jax.experimental.pallas import tpu as pltpu


def _round_up(n, m):
    return ((n + m - 1) // m) * m


def _mlp_kernel(x_ref, w1_ref, b1_ref, w2_ref, b2_ref, o_ref):
    # x_ref : (TB, D_in)  f32 batch tile; cast to bf16 in-kernel (VPU, free here)
    # w1_ref: (D_in, H)   bf16, [K, N] layout  ->  x @ w1 == x @ W1.T
    # b1_ref: (1, H)      f32
    # w2_ref: (H, D_in)   bf16, [K, N] layout  ->  h @ w2 == h @ W2.T
    # b2_ref: (1, D_in)   f32
    x = x_ref[...].astype(jnp.bfloat16)
    h = jnp.dot(x, w1_ref[...], preferred_element_type=jnp.float32) + b1_ref[...]
    h = jnp.maximum(h, 0.0)                                   # ReLU (VPU)
    out = jnp.dot(h.astype(jnp.bfloat16), w2_ref[...],
                  preferred_element_type=jnp.float32) + b2_ref[...]
    o_ref[...] = out.astype(o_ref.dtype)


def prepare_params(w1, w2):
    """One-time (parameter-load) prep: PyTorch [out,in] f32 -> MXU-native [K,N] bf16."""
    w1_kn = jnp.asarray(w1).T.astype(jnp.bfloat16)   # [D_in, H]
    w2_kn = jnp.asarray(w2).T.astype(jnp.bfloat16)   # [H, D_in]
    return w1_kn, w2_kn


@functools.partial(jax.jit, static_argnames=("block_b", "out_dtype"))
def softmax_approximator(x, w1_kn, b1, w2_kn, b2, *, block_b=1024, out_dtype=None):
    """x: [B, D_in] f32; w1_kn: [D_in, H] bf16; b1: [H]; w2_kn: [H, D_in] bf16; b2: [D_in]."""
    B, d_in = x.shape
    hidden = w1_kn.shape[1]
    out_dtype = jnp.dtype(x.dtype if out_dtype is None else out_dtype)

    # Biases: tiny, keep f32 for accurate post-accumulation add.
    b1r = b1.reshape(1, hidden).astype(jnp.float32)
    b2r = b2.reshape(1, d_in).astype(jnp.float32)

    # Batch tile: as large as requested (multiple of 8 sublanes); no host-side pad,
    # the ragged last block is handled by Pallas OOB read-pad / write-mask.
    Bp = _round_up(B, 8)
    tb = min(block_b, Bp)
    if tb == Bp and Bp >= 512:
        # Would be a single oversized tile: split in two so both v7x TensorCores
        # get work and the x/out DMA can pipeline behind compute.
        tb = _round_up(Bp // 2, 8)
    grid = (pl.cdiv(B, tb),)

    flops = 4 * B * d_in * hidden               # two matmuls, 2 flops / MAC
    bytes_accessed = (B * d_in * x.dtype.itemsize            # x read (f32, once)
                      + 2 * hidden * d_in * 2                # weights (bf16, resident)
                      + (hidden + d_in) * 4                  # biases (f32)
                      + B * d_in * out_dtype.itemsize)       # output writeback

    return pl.pallas_call(
        _mlp_kernel,
        out_shape=jax.ShapeDtypeStruct((B, d_in), out_dtype),
        grid_spec=pltpu.PrefetchScalarGridSpec(
            num_scalar_prefetch=0,
            grid=grid,
            in_specs=[
                pl.BlockSpec((tb, d_in), lambda i: (i, 0)),        # x tile
                pl.BlockSpec((d_in, hidden), lambda i: (0, 0)),    # W1^T (resident)
                pl.BlockSpec((1, hidden), lambda i: (0, 0)),       # b1
                pl.BlockSpec((hidden, d_in), lambda i: (0, 0)),    # W2^T (resident)
                pl.BlockSpec((1, d_in), lambda i: (0, 0)),         # b2
            ],
            out_specs=pl.BlockSpec((tb, d_in), lambda i: (i, 0)),
        ),
        compiler_params=pltpu.CompilerParams(
            dimension_semantics=("parallel",)),
        cost_estimate=pl.CostEstimate(
            flops=flops, transcendentals=0, bytes_accessed=bytes_accessed),
    )(x, w1_kn, b1r, w2_kn, b2r)


def _reference(x, w1, b1, w2, b2):
    h = jnp.maximum(x @ w1.T + b1, 0.0)
    return h @ w2.T + b2


if __name__ == "__main__":
    input_size = 128     # module defaults
    hidden_size = 128
    batch = 512          # -> 2 x 256-row tiles, grid=(2,) parallel (both v7x TCs)

    key = jax.random.PRNGKey(0)
    kx, kw1, kb1, kw2, kb2 = jax.random.split(key, 5)

    x = jax.random.normal(kx, (batch, input_size), dtype=jnp.float32)
    w1 = jax.random.normal(kw1, (hidden_size, input_size), dtype=jnp.float32) * 0.05
    b1 = jax.random.normal(kb1, (hidden_size,), dtype=jnp.float32) * 0.05
    w2 = jax.random.normal(kw2, (input_size, hidden_size), dtype=jnp.float32) * 0.05
    b2 = jax.random.normal(kb2, (input_size,), dtype=jnp.float32) * 0.05

    # One-time parameter prep (outside the hot path): bf16 + [K, N] layout.
    w1_kn, w2_kn = prepare_params(w1, w2)

    ref = _reference(x, w1, b1, w2, b2)

    # Main path: f32 in, f32 out (bf16 MXU operands, f32 accumulation).
    out = softmax_approximator(x, w1_kn, b1, w2_kn, b2)
    out = jax.block_until_ready(out)
    assert out.shape == (batch, input_size)
    assert out.dtype == jnp.float32
    assert jnp.allclose(out, ref, atol=3e-2, rtol=3e-2), "mismatch vs reference"

    # Ragged small batch: exercises the partial-block OOB-masked path (no host pad).
    out_small = softmax_approximator(x[:37], w1_kn, b1, w2_kn, b2)
    out_small = jax.block_until_ready(out_small)
    assert out_small.shape == (37, input_size)
    assert jnp.allclose(out_small, ref[:37], atol=3e-2, rtol=3e-2), "mismatch (ragged batch)"

    # Optional bf16 output: halves the dominant HBM writeback stream.
    out_bf16 = softmax_approximator(x, w1_kn, b1, w2_kn, b2, out_dtype=jnp.bfloat16)
    out_bf16 = jax.block_until_ready(out_bf16)
    assert out_bf16.dtype == jnp.bfloat16
    assert jnp.allclose(out_bf16.astype(jnp.float32), ref, atol=8e-2, rtol=8e-2), \
        "mismatch (bf16 output)"

    print("KERNEL_OK")
</pallas_src>

<mosaic_0001>
module attributes {stable_mosaic.version = 11 : i64} {
  func.func @_mlp_kernel(%arg0: i32, %arg1: memref<256x128xf32, #tpu.memory_space<vmem>>, %arg2: memref<128x128xbf16, #tpu.memory_space<vmem>>, %arg3: memref<1x128xf32, #tpu.memory_space<vmem>>, %arg4: memref<128x128xbf16, #tpu.memory_space<vmem>>, %arg5: memref<1x128xf32, #tpu.memory_space<vmem>>, %arg6: memref<256x128xf32, #tpu.memory_space<vmem>>) attributes {dimension_semantics = [#tpu.dimension_semantics<parallel>], iteration_bounds = array<i64: 2>, scalar_prefetch = 0 : i64, scratch_operands = 0 : i64, tpu.core_type = #tpu.core_type<tc>, window_params = [{transform_indices = @transform_0, window_bounds = array<i64: 256, 128>}, {pipeline_mode = #tpu.pipeline_mode<synchronous>, transform_indices = @transform_1, window_bounds = array<i64: 128, 128>}, {pipeline_mode = #tpu.pipeline_mode<synchronous>, transform_indices = @transform_2, window_bounds = array<i64: 1, 128>}, {pipeline_mode = #tpu.pipeline_mode<synchronous>, transform_indices = @transform_3, window_bounds = array<i64: 128, 128>}, {pipeline_mode = #tpu.pipeline_mode<synchronous>, transform_indices = @transform_4, window_bounds = array<i64: 1, 128>}, {transform_indices = @transform_5, window_bounds = array<i64: 256, 128>}]} {
    %c0 = arith.constant 0 : index
    %c0_0 = arith.constant 0 : index
    %0 = vector.load %arg1[%c0, %c0_0] : memref<256x128xf32, #tpu.memory_space<vmem>>, vector<256x128xf32>
    %1 = arith.truncf %0 : vector<256x128xf32> to vector<256x128xbf16>
    %c0_1 = arith.constant 0 : index
    %c0_2 = arith.constant 0 : index
    %2 = vector.load %arg2[%c0_1, %c0_2] : memref<128x128xbf16, #tpu.memory_space<vmem>>, vector<128x128xbf16>
    %cst = arith.constant dense<0.000000e+00> : vector<256x128xf32>
    %3 = tpu.matmul %1, %2, %cst {dimension_numbers = #tpu.dot_dimension_numbers<[1], [0], [0], [1], [0, 0, 1, 1], [], []>} : vector<256x128xbf16>, vector<128x128xbf16>, vector<256x128xf32> -> vector<256x128xf32>
    %c0_3 = arith.constant 0 : index
    %c0_4 = arith.constant 0 : index
    %4 = vector.load %arg3[%c0_3, %c0_4] : memref<1x128xf32, #tpu.memory_space<vmem>>, vector<1x128xf32>
    %5 = vector.broadcast %4 : vector<1x128xf32> to vector<256x128xf32>
    %6 = arith.addf %3, %5 : vector<256x128xf32>
    %cst_5 = arith.constant 0.000000e+00 : f32
    %7 = vector.broadcast %cst_5 : f32 to vector<256x128xf32>
    %8 = arith.maximumf %6, %7 : vector<256x128xf32>
    %9 = arith.truncf %8 : vector<256x128xf32> to vector<256x128xbf16>
    %c0_6 = arith.constant 0 : index
    %c0_7 = arith.constant 0 : index
    %10 = vector.load %arg4[%c0_6, %c0_7] : memref<128x128xbf16, #tpu.memory_space<vmem>>, vector<128x128xbf16>
    %cst_8 = arith.constant dense<0.000000e+00> : vector<256x128xf32>
    %11 = tpu.matmul %9, %10, %cst_8 {dimension_numbers = #tpu.dot_dimension_numbers<[1], [0], [0], [1], [0, 0, 1, 1], [], []>} : vector<256x128xbf16>, vector<128x128xbf16>, vector<256x128xf32> -> vector<256x128xf32>
    %c0_9 = arith.constant 0 : index
    %c0_10 = arith.constant 0 : index
    %12 = vector.load %arg5[%c0_9, %c0_10] : memref<1x128xf32, #tpu.memory_space<vmem>>, vector<1x128xf32>
    %13 = vector.broadcast %12 : vector<1x128xf32> to vector<256x128xf32>
    %14 = arith.addf %11, %13 : vector<256x128xf32>
    %c0_11 = arith.constant 0 : index
    %c0_12 = arith.constant 0 : index
    %15 = vector.load %arg6[%c0_11, %c0_12] : memref<256x128xf32, #tpu.memory_space<vmem>>, vector<256x128xf32>
    tpu.vector_store %arg6[%c0_11, %c0_12], %14 {strides = array<i32>} : memref<256x128xf32, #tpu.memory_space<vmem>>, vector<256x128xf32>,
    return
  }
  func.func @transform_0(%arg0: i32) -> (i32, i32) {
    %c0_i32 = arith.constant 0 : i32
    %c0_i32_0 = arith.constant 0 : i32
    return %arg0, %c0_i32 : i32, i32
  }
  func.func @transform_1(%arg0: i32) -> (i32, i32) {
    %c0_i32 = arith.constant 0 : i32
    %c0_i32_0 = arith.constant 0 : i32
    %c0_i32_1 = arith.constant 0 : i32
    return %c0_i32, %c0_i32_0 : i32, i32
  }
  func.func @transform_2(%arg0: i32) -> (i32, i32) {
    %c0_i32 = arith.constant 0 : i32
    %c0_i32_0 = arith.constant 0 : i32
    %c0_i32_1 = arith.constant 0 : i32
    return %c0_i32, %c0_i32_0 : i32, i32
  }
  func.func @transform_3(%arg0: i32) -> (i32, i32) {
    %c0_i32 = arith.constant 0 : i32
    %c0_i32_0 = arith.constant 0 : i32
    %c0_i32_1 = arith.constant 0 : i32
    return %c0_i32, %c0_i32_0 : i32, i32
  }
  func.func @transform_4(%arg0: i32) -> (i32, i32) {
    %c0_i32 = arith.constant 0 : i32
    %c0_i32_0 = arith.constant 0 : i32
    %c0_i32_1 = arith.constant 0 : i32
    return %c0_i32, %c0_i32_0 : i32, i32
  }
  func.func @transform_5(%arg0: i32) -> (i32, i32) {
    %c0_i32 = arith.constant 0 : i32
    %c0_i32_0 = arith.constant 0 : i32
    return %arg0, %c0_i32 : i32, i32
  }
}

</mosaic_0001>

<llo_original>
// kernel: softmax_approximator.1
$region0: #{softmax_approximator.1}
  #allocation0 [shape = 'u32[]', space=smem, size = 0x4, offset = 0x4, fixed_abs, tag = 'smem constant byte address 0x4 - core index']
  #allocation1 [shape = 'u32[72,128]{1,0:T(1,128)}', space=vmem, size = 0x9000, scoped, tag = 'internal scratch']
  %s0 = inlined_call_operand.hbm [shape: f32[512,128], index: 0, kind: input, shape index: {}]
  %s1 = inlined_call_operand.hbm [shape: bf16[128,128], index: 1, kind: input, shape index: {}]
  %s2 = inlined_call_operand.vmem [shape: f32[1,128], index: 2, kind: input, shape index: {}]
  %s3 = inlined_call_operand.hbm [shape: bf16[128,128], index: 3, kind: input, shape index: {}]
  %s4 = inlined_call_operand.vmem [shape: f32[1,128], index: 4, kind: input, shape index: {}]
  %s5 = inlined_call_operand.hbm [shape: f32[512,128], index: 5, kind: output, shape index: {}]
  %s6 = sld [smem:[#allocation0]]
  $region65: #{softmax_approximator.1} parent=0
    _
  %s8 = ssub.s32 1, %s6
  %s9 = scalar_select 0, %s8, %s6
  $region1: #{softmax_approximator.1} parent=0
    #allocation2 [shape = 'u8[262144]{0}', space=vmem, size = 0x40000, scoped, tag = 'input window, operand 0']
    #allocation3 [shape = 's32[2]{0}', space=sflag, size = 0x8, scoped, tag = 'scoped memory for softmax_approximator.1']
    #allocation4 [shape = 's32[2]{0}', space=sflag, size = 0x8, scoped, tag = 'scoped memory for softmax_approximator.1']
    #allocation5 [shape = 'u8[32768]{0}', space=vmem, size = 0x8000, scoped, tag = 'input window, operand 1, single buffered']
    #allocation6 [shape = 's32[1]{0}', space=sflag, size = 0x4, scoped, tag = 'scoped memory for softmax_approximator.1']
    #allocation7 [shape = 'u8[32768]{0}', space=vmem, size = 0x8000, scoped, tag = 'input window, operand 3, single buffered']
    #allocation8 [shape = 'u8[262144]{0}', space=vmem, size = 0x40000, scoped, tag = 'output window, operand 0']
    %10 = vsyncpa [#allocation3], 0
    %s11 = scalar_lea.sflag [#allocation3], 1
    %12 = vsyncpa %s11, 0
    %13 = vsyncpa [#allocation6], 0
    %14 = vsyncpa [#allocation4], 0
    %s15 = scalar_lea.sflag [#allocation4], 1
    %16 = vsyncpa %s15, 0
    loop: start=0, step=1, limit=4
    $region2: #{softmax_approximator.1} parent=1 // loop_pre_header
      _
    $region3: #{softmax_approximator.1} parent=1 // loop_header
      %s18 = sphi 0, %s22
      %p19 = scmp.ge.s32.totalorder %s18, 4
      %s28 = sphi 0, %s30
      %s31 = sphi 0, %s28
      %s32 = sphi 0, %s31
      %s48 = sphi 0, %s32
      %s52 = sphi 0, %s52
      %s54 = sphi 0, %s52
      %s55 = sphi 0, %s54
      %s69 = sphi 0, %s55
      %s73 = sphi 0, %s73
      %s75 = sphi 0, %s73
      %s76 = sphi 0, %s75
      %s90 = sphi 0, %s76
      %s94 = sphi 0, %s94
      %s96 = sphi 0, %s94
      %s97 = sphi 0, %s96
      %s111 = sphi 0, %s97
      %s115 = sphi 0, %s115
      %s117 = sphi 0, %s115
      %s118 = sphi 0, %s117
      %s132 = sphi 0, %s118
      %s138 = sphi 0, %s140
      %s141 = sphi 0, %s138
      %s142 = sphi 0, %s141
      %s158 = sphi 0, %s142
    $region4: #{softmax_approximator.1} parent=1 // loop_header_branch
      %21 = sbr.rel (%p19) target = $region8
    $region5: #{softmax_approximator.1} parent=1 // loop_body
      %s23 = ssub.s32 %s18, 1
      %s24 = ssub.s32 %s18, 2
      %s25 = sadd.s32 %s18, 1
      %s26 = ssub.s32 %s18, %s25
      %p27 = scmp.eq.s32.totalorder %s26, 0
      %s29 = sadd.s32 %s28, 1
      %s30 = scalar_select %p27, %s28, %s29
      %p33 = pneg %p27
      %p34 = scmp.eq.s32.totalorder %s18, 1
      %p35 = por %p33, %p34
      %p36 = scmp.ne.s32.totalorder %s28, %s31
      %p37 = scmp.eq.s32.totalorder %s18, 0
      %p38 = por %p36, %p37
      %p39 = scmp.ne.s32.totalorder %s28, %s31
      %p40 = scmp.eq.s32.totalorder %s23, 1
      %p41 = por %p39, %p40
      %p42 = scmp.ne.s32.totalorder %s31, %s32
      %p43 = scmp.eq.s32.totalorder %s23, 0
      %p44 = por %p42, %p43
      %p45 = scmp.ne.s32.totalorder %s31, %s32
      %p46 = scmp.eq.s32.totalorder %s24, 1
      %p47 = por %p45, %p46
      %p49 = scmp.ne.s32.totalorder %s32, %s48
      %p50 = scmp.eq.s32.totalorder %s24, 0
      %p51 = por %p49, %p50
      %s53 = sadd.s32 %s52, 1
      %p56 = scmp.eq.s32.totalorder %s18, 1
      %p57 = scmp.ne.s32.totalorder %s52, %s54
      %p58 = scmp.eq.s32.totalorder %s18, 0
      %p59 = por %p57, %p58
      %p60 = scmp.ne.s32.totalorder %s52, %s54
      %p61 = scmp.eq.s32.totalorder %s23, 1
      %p62 = por %p60, %p61
      %p63 = scmp.ne.s32.totalorder %s54, %s55
      %p64 = scmp.eq.s32.totalorder %s23, 0
      %p65 = por %p63, %p64
      %p66 = scmp.ne.s32.totalorder %s54, %s55
      %p67 = scmp.eq.s32.totalorder %s24, 1
      %p68 = por %p66, %p67
      %p70 = scmp.ne.s32.totalorder %s55, %s69
      %p71 = scmp.eq.s32.totalorder %s24, 0
      %p72 = por %p70, %p71
      %s74 = sadd.s32 %s73, 1
      %p77 = scmp.eq.s32.totalorder %s18, 1
      %p78 = scmp.ne.s32.totalorder %s73, %s75
      %p79 = scmp.eq.s32.totalorder %s18, 0
      %p80 = por %p78, %p79
      %p81 = scmp.ne.s32.totalorder %s73, %s75
      %p82 = scmp.eq.s32.totalorder %s23, 1
      %p83 = por %p81, %p82
      %p84 = scmp.ne.s32.totalorder %s75, %s76
      %p85 = scmp.eq.s32.totalorder %s23, 0
      %p86 = por %p84, %p85
      %p87 = scmp.ne.s32.totalorder %s75, %s76
      %p88 = scmp.eq.s32.totalorder %s24, 1
      %p89 = por %p87, %p88
      %p91 = scmp.ne.s32.totalorder %s76, %s90
      %p92 = scmp.eq.s32.totalorder %s24, 0
      %p93 = por %p91, %p92
      %s95 = sadd.s32 %s94, 1
      %p98 = scmp.eq.s32.totalorder %s18, 1
      %p99 = scmp.ne.s32.totalorder %s94, %s96
      %p100 = scmp.eq.s32.totalorder %s18, 0
      %p101 = por %p99, %p100
      %p102 = scmp.ne.s32.totalorder %s94, %s96
      %p103 = scmp.eq.s32.totalorder %s23, 1
      %p104 = por %p102, %p103
      %p105 = scmp.ne.s32.totalorder %s96, %s97
      %p106 = scmp.eq.s32.totalorder %s23, 0
      %p107 = por %p105, %p106
      %p108 = scmp.ne.s32.totalorder %s96, %s97
      %p109 = scmp.eq.s32.totalorder %s24, 1
      %p110 = por %p108, %p109
      %p112 = scmp.ne.s32.totalorder %s97, %s111
      %p113 = scmp.eq.s32.totalorder %s24, 0
      %p114 = por %p112, %p113
      %s116 = sadd.s32 %s115, 1
      %p119 = scmp.eq.s32.totalorder %s18, 1
      %p120 = scmp.ne.s32.totalorder %s115, %s117
      %p121 = scmp.eq.s32.totalorder %s18, 0
      %p122 = por %p120, %p121
      %p123 = scmp.ne.s32.totalorder %s115, %s117
      %p124 = scmp.eq.s32.totalorder %s23, 1
      %p125 = por %p123, %p124
      %p126 = scmp.ne.s32.totalorder %s117, %s118
      %p127 = scmp.eq.s32.totalorder %s23, 0
      %p128 = por %p126, %p127
      %p129 = scmp.ne.s32.totalorder %s117, %s118
      %p130 = scmp.eq.s32.totalorder %s24, 1
      %p131 = por %p129, %p130
      %p133 = scmp.ne.s32.totalorder %s118, %s132
      %p134 = scmp.eq.s32.totalorder %s24, 0
      %p135 = por %p133, %p134
      %s136 = ssub.s32 %s18, %s25
      %p137 = scmp.eq.s32.totalorder %s136, 0
      %s139 = sadd.s32 %s138, 1
      %s140 = scalar_select %p137, %s138, %s139
      %p143 = pneg %p137
      %p144 = scmp.eq.s32.totalorder %s18, 1
      %p145 = por %p143, %p144
      %p146 = scmp.ne.s32.totalorder %s138, %s141
      %p147 = scmp.eq.s32.totalorder %s18, 0
      %p148 = por %p146, %p147
      %p149 = scmp.ne.s32.totalorder %s138, %s141
      %p150 = scmp.eq.s32.totalorder %s23, 1
      %p151 = por %p149, %p150
      %p152 = scmp.ne.s32.totalorder %s141, %s142
      %p153 = scmp.eq.s32.totalorder %s23, 0
      %p154 = por %p152, %p153
      %p155 = scmp.ne.s32.totalorder %s141, %s142
      %p156 = scmp.eq.s32.totalorder %s24, 1
      %p157 = por %p155, %p156
      %p159 = scmp.ne.s32.totalorder %s142, %s158
      %p160 = scmp.eq.s32.totalorder %s24, 0
      %p161 = por %p159, %p160
      %p162 = scmp.le.s32.totalorder 1, %s18
      %p163 = scmp.lt.s32.totalorder %s18, 3
      %p164 = pnand %p162, %p163
      %p165 = pneg %p164
      // Predicated region
      $region9: #{softmax_approximator.1} parent=5 // pred_check
        _
      $region10: #{softmax_approximator.1} parent=5 // pred_check_branch
        %167 = sbr.rel (%p164) target = $region12
      $region11: #{softmax_approximator.1} parent=5 // pred_region
        %s168 = ssub.s32 %s18, 1
        // Predicated region
        $region13: #{softmax_approximator.1} parent=11 // pred_check
          %p169 = pneg %p65
        $region14: #{softmax_approximator.1} parent=11 // pred_check_branch
          %171 = sbr.rel (%p169) target = $region16
        $region15: #{softmax_approximator.1} parent=11 // pred_region
          %173 = vsyncadd [#allocation6], 0
          %s174 = sshll.u32 %s1, 4
          %s175 = int_to_ptr.hbm [resolvable:$true] %s174
          %s176 = sshll.u32 [#allocation5], 4
          %s177 = int_to_ptr.vmem [resolvable:$true] %s176
          %182 = dma.hbm_to_vmem [thread:$0]  %s175, 1024, %s177, [#allocation6], 64, 64, 4
        $region16: #{softmax_approximator.1} parent=11 // pred_fallthru
          _
        // Predicated region
        $region17: #{softmax_approximator.1} parent=11 // pred_check
          %p183 = pneg %p86
        $region18: #{softmax_approximator.1} parent=11 // pred_check_branch
          %185 = sbr.rel (%p183) target = $region20
        $region19: #{softmax_approximator.1} parent=11 // pred_region
          _
        $region20: #{softmax_approximator.1} parent=11 // pred_fallthru
          _
        // Predicated region
        $region21: #{softmax_approximator.1} parent=11 // pred_check
          %p186 = pneg %p107
        $region22: #{softmax_approximator.1} parent=11 // pred_check_branch
          %188 = sbr.rel (%p186) target = $region24
        $region23: #{softmax_approximator.1} parent=11 // pred_region
          %190 = vsyncadd [#allocation6], 0
          %s191 = sshll.u32 %s3, 4
          %s192 = int_to_ptr.hbm [resolvable:$true] %s191
          %s193 = sshll.u32 [#allocation7], 4
          %s194 = int_to_ptr.vmem [resolvable:$true] %s193
          %199 = dma.hbm_to_vmem [thread:$0]  %s192, 1024, %s194, [#allocation6], 64, 64, 4
        $region24: #{softmax_approximator.1} parent=11 // pred_fallthru
          _
        // Predicated region
        $region25: #{softmax_approximator.1} parent=11 // pred_check
          %p200 = pneg %p128
        $region26: #{softmax_approximator.1} parent=11 // pred_check_branch
          %202 = sbr.rel (%p200) target = $region28
        $region27: #{softmax_approximator.1} parent=11 // pred_region
          _
        $region28: #{softmax_approximator.1} parent=11 // pred_fallthru
          _
      $region12: #{softmax_approximator.1} parent=5 // pred_fallthru
        _
      %p203 = scmp.lt.s32.totalorder %s18, 2
      // Predicated region
      $region29: #{softmax_approximator.1} parent=5 // pred_check
        %p204 = pneg %p203
      $region30: #{softmax_approximator.1} parent=5 // pred_check_branch
        %206 = sbr.rel (%p204) target = $region32
      $region31: #{softmax_approximator.1} parent=5 // pred_region
        // Predicated region
        $region33: #{softmax_approximator.1} parent=31 // pred_check
          %p207 = pneg %p38
        $region34: #{softmax_approximator.1} parent=31 // pred_check_branch
          %209 = sbr.rel (%p207) target = $region36
        $region35: #{softmax_approximator.1} parent=31 // pred_region
          %s210 = sand.u32 %s28, 1
          %s211 = scalar_lea.sflag [#allocation3], %s210
          %s212 = sand.u32 %s28, 1
          %s213 = smul.addr %s212, 256
          %s214 = scalar_lea.vmem [#allocation2], %s213
          %s215 = smul.u32 32, %s18
          %217 = vsyncadd %s211, 0
          %s218 = smul.addr %s215, 8
          %s219 = scalar_lea.hbm %s0, %s218
          %s220 = sshll.u32 %s219, 4
          %s221 = int_to_ptr.hbm [resolvable:$true] %s220
          %s222 = sshll.u32 %s214, 4
          %s223 = int_to_ptr.vmem [resolvable:$true] %s222
          %228 = dma.hbm_to_vmem [thread:$0]  %s221, 4096, %s223, %s211, 128, 128, 8
        $region36: #{softmax_approximator.1} parent=31 // pred_fallthru
          _
      $region32: #{softmax_approximator.1} parent=5 // pred_fallthru
        _
      %p229 = scmp.le.s32.totalorder 1, %s18
      %p230 = scmp.lt.s32.totalorder %s18, 3
      %p231 = pnand %p229, %p230
      %p232 = pneg %p231
      // Predicated region
      $region37: #{softmax_approximator.1} parent=5 // pred_check
        _
      $region38: #{softmax_approximator.1} parent=5 // pred_check_branch
        %234 = sbr.rel (%p231) target = $region40
      $region39: #{softmax_approximator.1} parent=5 // pred_region
        %s235 = ssub.s32 %s18, 1
        %s236 = sand.u32 %s31, 1
        %s237 = scalar_lea.sflag [#allocation3], %s236
        %s238 = sand.u32 %s31, 1
        %s239 = smul.addr %s238, 256
        %s240 = scalar_lea.vmem [#allocation2], %s239
        // Predicated region
        $region41: #{softmax_approximator.1} parent=39 // pred_check
          %p241 = pneg %p44
        $region42: #{softmax_approximator.1} parent=39 // pred_check_branch
          %243 = sbr.rel (%p241) target = $region44
        $region43: #{softmax_approximator.1} parent=39 // pred_region
          %245 = dma.done %s237, 4096
        $region44: #{softmax_approximator.1} parent=39 // pred_fallthru
          _
        // Predicated region
        $region45: #{softmax_approximator.1} parent=39 // pred_check
          %p246 = pneg %p65
        $region46: #{softmax_approximator.1} parent=39 // pred_check_branch
          %248 = sbr.rel (%p246) target = $region48
        $region47: #{softmax_approximator.1} parent=39 // pred_region
          %250 = dma.done [#allocation6], 1024
        $region48: #{softmax_approximator.1} parent=39 // pred_fallthru
          _
        // Predicated region
        $region49: #{softmax_approximator.1} parent=39 // pred_check
          %p251 = pneg %p107
        $region50: #{softmax_approximator.1} parent=39 // pred_check_branch
          %253 = sbr.rel (%p251) target = $region52
        $region51: #{softmax_approximator.1} parent=39 // pred_region
          %255 = dma.done [#allocation6], 1024
        $region52: #{softmax_approximator.1} parent=39 // pred_fallthru
          _
        %s256 = sand.u32 %s31, 1
        %s257 = scalar_lea.sflag [#allocation3], %s256
        %s258 = sand.u32 %s31, 1
        %s259 = smul.addr %s258, 256
        %s260 = scalar_lea.vmem [#allocation2], %s259
        %p261 = pneg %p44
        %p262 = pneg %p41
        %p263 = pneg %p65
        %p264 = pneg %p62
        %p265 = pneg %p86
        %p266 = pneg %p83
        %p267 = pneg %p107
        %p268 = pneg %p104
        %p269 = pneg %p128
        %p270 = pneg %p125
        %p271 = pneg %p154
        %p272 = pneg %p151
        %s273 = sand.u32 %s141, 1
        %s274 = scalar_lea.sflag [#allocation4], %s273
        %s275 = sand.u32 %s141, 1
        %s276 = smul.addr %s275, 256
        %s277 = scalar_lea.vmem [#allocation8], %s276
        %s278 = smul.u32 32, %s23
        %s279 = smul.u32 32, %s23
        %v280 = vld [vmem:[%s240] sm:$0xff]
        %v281 = vld [vmem:[%s240 + $0x8] sm:$0xff]
        %v282 = vld [vmem:[%s240 + $0x10] sm:$0xff]
        %v283 = vld [vmem:[%s240 + $0x18] sm:$0xff]
        %v284 = vld [vmem:[%s240 + $0x20] sm:$0xff]
        %v285 = vld [vmem:[%s240 + $0x28] sm:$0xff]
        %v286 = vld [vmem:[%s240 + $0x30] sm:$0xff]
        %v287 = vld [vmem:[%s240 + $0x38] sm:$0xff]
        %v288 = vld [vmem:[%s240 + $0x40] sm:$0xff]
        %v289 = vld [vmem:[%s240 + $0x48] sm:$0xff]
        %v290 = vld [vmem:[%s240 + $0x50] sm:$0xff]
        %v291 = vld [vmem:[%s240 + $0x58] sm:$0xff]
        %v292 = vld [vmem:[%s240 + $0x60] sm:$0xff]
        %v293 = vld [vmem:[%s240 + $0x68] sm:$0xff]
        %v294 = vld [vmem:[%s240 + $0x70] sm:$0xff]
        %v295 = vld [vmem:[%s240 + $0x78] sm:$0xff]
        %v296 = vld [vmem:[%s240 + $0x80] sm:$0xff]
        %v297 = vld [vmem:[%s240 + $0x88] sm:$0xff]
        %v298 = vld [vmem:[%s240 + $0x90] sm:$0xff]
        %v299 = vld [vmem:[%s240 + $0x98] sm:$0xff]
        %v300 = vld [vmem:[%s240 + $0xa0] sm:$0xff]
        %v301 = vld [vmem:[%s240 + $0xa8] sm:$0xff]
        %v302 = vld [vmem:[%s240 + $0xb0] sm:$0xff]
        %v303 = vld [vmem:[%s240 + $0xb8] sm:$0xff]
        %v304 = vld [vmem:[%s240 + $0xc0] sm:$0xff]
        %v305 = vld [vmem:[%s240 + $0xc8] sm:$0xff]
        %v306 = vld [vmem:[%s240 + $0xd0] sm:$0xff]
        %v307 = vld [vmem:[%s240 + $0xd8] sm:$0xff]
        %v308 = vld [vmem:[%s240 + $0xe0] sm:$0xff]
        %v309 = vld [vmem:[%s240 + $0xe8] sm:$0xff]
        %v310 = vld [vmem:[%s240 + $0xf0] sm:$0xff]
        %v311 = vld [vmem:[%s240 + $0xf8] sm:$0xff]
        %v312 = vpack.c.bf16 %v281, %v280
        %v313 = vpack.c.bf16 %v283, %v282
        %v314 = vpack.c.bf16 %v285, %v284
        %v315 = vpack.c.bf16 %v287, %v286
        %v316 = vpack.c.bf16 %v289, %v288
        %v317 = vpack.c.bf16 %v291, %v290
        %v318 = vpack.c.bf16 %v293, %v292
        %v319 = vpack.c.bf16 %v295, %v294
        %v320 = vpack.c.bf16 %v297, %v296
        %v321 = vpack.c.bf16 %v299, %v298
        %v322 = vpack.c.bf16 %v301, %v300
        %v323 = vpack.c.bf16 %v303, %v302
        %v324 = vpack.c.bf16 %v305, %v304
        %v325 = vpack.c.bf16 %v307, %v306
        %v326 = vpack.c.bf16 %v309, %v308
        %v327 = vpack.c.bf16 %v311, %v310
        %v328 = vld [vmem:[#allocation5] sm:$0xf]
        %v329 = vld [vmem:[#allocation5 + $0x4] sm:$0xf]
        %v330 = vld [vmem:[#allocation5 + $0x8] sm:$0xf]
        %v331 = vld [vmem:[#allocation5 + $0xc] sm:$0xf]
        %v332 = vld [vmem:[#allocation5 + $0x10] sm:$0xf]
        %v333 = vld [vmem:[#allocation5 + $0x14] sm:$0xf]
        %v334 = vld [vmem:[#allocation5 + $0x18] sm:$0xf]
        %v335 = vld [vmem:[#allocation5 + $0x1c] sm:$0xf]
        %v336 = vld [vmem:[#allocation5 + $0x20] sm:$0xf]
        %v337 = vld [vmem:[#allocation5 + $0x24] sm:$0xf]
        %v338 = vld [vmem:[#allocation5 + $0x28] sm:$0xf]
        %v339 = vld [vmem:[#allocation5 + $0x2c] sm:$0xf]
        %v340 = vld [vmem:[#allocation5 + $0x30] sm:$0xf]
        %v341 = vld [vmem:[#allocation5 + $0x34] sm:$0xf]
        %v342 = vld [vmem:[#allocation5 + $0x38] sm:$0xf]
        %v343 = vld [vmem:[#allocation5 + $0x3c] sm:$0xf]
        %v344 = vld [vmem:[%s2] sm:$0x1]
        %v346 = vperm.slane %v344, 0
        %v364 = vunpack.c.l.b16 %v328
        %v365 = vunpack.c.l.b16 %v329
        %v366 = vunpack.c.l.b16 %v330
        %v367 = vunpack.c.l.b16 %v331
        %v368 = vunpack.c.l.b16 %v332
        %v369 = vunpack.c.l.b16 %v333
        %v370 = vunpack.c.l.b16 %v334
        %v371 = vunpack.c.l.b16 %v335
        %v372 = vunpack.c.l.b16 %v336
        %v373 = vunpack.c.l.b16 %v337
        %v374 = vunpack.c.l.b16 %v338
        %v375 = vunpack.c.l.b16 %v339
        %v376 = vunpack.c.l.b16 %v340
        %v377 = vunpack.c.l.b16 %v341
        %v378 = vunpack.c.l.b16 %v342
        %v379 = vunpack.c.l.b16 %v343
        %v380 = vpack.c.b16 %v365, %v364
        %v381 = vpack.c.b16 %v367, %v366
        %v382 = vpack.c.b16 %v369, %v368
        %v383 = vpack.c.b16 %v371, %v370
        %v384 = vpack.c.b16 %v373, %v372
        %v385 = vpack.c.b16 %v375, %v374
        %v386 = vpack.c.b16 %v377, %v376
        %v387 = vpack.c.b16 %v379, %v378
        %396 = vmatpush.bf16.msra.mxu0 %v387
        %397 = vmatpush.bf16.msra.mxu0 %v386
        %398 = vmatpush.bf16.msra.mxu0 %v385
        %399 = vmatpush.bf16.msra.mxu0 %v384
        %400 = vmatpush.bf16.msra.mxu0 %v383
        %401 = vmatpush.bf16.msra.mxu0 %v382
        %402 = vmatpush.bf16.msra.mxu0 %v381
        %403 = vmatpush.bf16.msra.mxu0 %v380
        %404 = vmatmul.bf16.gmra.mxu0 %v312
        %v405 = vpop.f32.mrf.mxu0
        %v406 = vadd.f32 %v346, %v405
        %v407 = vpop.f32.mrf.mxu0
        %v408 = vadd.f32 %v346, %v407
        %409 = vmatmul.bf16.gmra.mxu0 %v313
        %v410 = vpop.f32.mrf.mxu0
        %v411 = vadd.f32 %v346, %v410
        %v412 = vpop.f32.mrf.mxu0
        %v413 = vadd.f32 %v346, %v412
        %414 = vmatmul.bf16.gmra.mxu0 %v314
        %v415 = vpop.f32.mrf.mxu0
        %v416 = vadd.f32 %v346, %v415
        %v417 = vpop.f32.mrf.mxu0
        %v418 = vadd.f32 %v346, %v417
        %419 = vmatmul.bf16.gmra.mxu0 %v315
        %v420 = vpop.f32.mrf.mxu0
        %v421 = vadd.f32 %v346, %v420
        %v422 = vpop.f32.mrf.mxu0
        %v423 = vadd.f32 %v346, %v422
        %424 = vmatmul.bf16.gmra.mxu0 %v316
        %v425 = vpop.f32.mrf.mxu0
        %v426 = vadd.f32 %v346, %v425
        %v427 = vpop.f32.mrf.mxu0
        %v428 = vadd.f32 %v346, %v427
        %429 = vmatmul.bf16.gmra.mxu0 %v317
        %v430 = vpop.f32.mrf.mxu0
        %v431 = vadd.f32 %v346, %v430
        %v432 = vpop.f32.mrf.mxu0
        %v433 = vadd.f32 %v346, %v432
        %434 = vmatmul.bf16.gmra.mxu0 %v318
        %v435 = vpop.f32.mrf.mxu0
        %v436 = vadd.f32 %v346, %v435
        %v437 = vpop.f32.mrf.mxu0
        %v438 = vadd.f32 %v346, %v437
        %439 = vmatmul.bf16.gmra.mxu0 %v319
        %v440 = vpop.f32.mrf.mxu0
        %v441 = vadd.f32 %v346, %v440
        %v442 = vpop.f32.mrf.mxu0
        %v443 = vadd.f32 %v346, %v442
        %444 = vmatmul.bf16.gmra.mxu0 %v320
        %v445 = vpop.f32.mrf.mxu0
        %v446 = vadd.f32 %v346, %v445
        %v447 = vpop.f32.mrf.mxu0
        %v448 = vadd.f32 %v346, %v447
        %449 = vmatmul.bf16.gmra.mxu0 %v321
        %v450 = vpop.f32.mrf.mxu0
        %v451 = vadd.f32 %v346, %v450
        %v452 = vpop.f32.mrf.mxu0
        %v453 = vadd.f32 %v346, %v452
        %454 = vmatmul.bf16.gmra.mxu0 %v322
        %v455 = vpop.f32.mrf.mxu0
        %v456 = vadd.f32 %v346, %v455
        %v457 = vpop.f32.mrf.mxu0
        %v458 = vadd.f32 %v346, %v457
        %459 = vmatmul.bf16.gmra.mxu0 %v323
        %v460 = vpop.f32.mrf.mxu0
        %v461 = vadd.f32 %v346, %v460
        %v462 = vpop.f32.mrf.mxu0
        %v463 = vadd.f32 %v346, %v462
        %464 = vmatmul.bf16.gmra.mxu0 %v324
        %v465 = vpop.f32.mrf.mxu0
        %v466 = vadd.f32 %v346, %v465
        %v467 = vpop.f32.mrf.mxu0
        %v468 = vadd.f32 %v346, %v467
        %469 = vmatmul.bf16.gmra.mxu0 %v325
        %v470 = vpop.f32.mrf.mxu0
        %v471 = vadd.f32 %v346, %v470
        %v472 = vpop.f32.mrf.mxu0
        %v473 = vadd.f32 %v346, %v472
        %474 = vmatmul.bf16.gmra.mxu0 %v326
        %v475 = vpop.f32.mrf.mxu0
        %v476 = vadd.f32 %v346, %v475
        %v477 = vpop.f32.mrf.mxu0
        %v478 = vadd.f32 %v346, %v477
        %479 = vmatmul.bf16.gmra.mxu0 %v327
        %v480 = vpop.f32.mrf.mxu0
        %v481 = vadd.f32 %v346, %v480
        %v482 = vpop.f32.mrf.mxu0
        %v483 = vadd.f32 %v346, %v482
        %484 = vdwg.mxu0
        %v485 = vmax.f32 %v406, 0.0
        %v486 = vmax.f32 %v408, 0.0
        %v487 = vmax.f32 %v411, 0.0
        %v488 = vmax.f32 %v413, 0.0
        %v489 = vmax.f32 %v416, 0.0
        %v490 = vmax.f32 %v418, 0.0
        %v491 = vmax.f32 %v421, 0.0
        %v492 = vmax.f32 %v423, 0.0
        %v493 = vmax.f32 %v426, 0.0
        %v494 = vmax.f32 %v428, 0.0
        %v495 = vmax.f32 %v431, 0.0
        %v496 = vmax.f32 %v433, 0.0
        %v497 = vmax.f32 %v436, 0.0
        %v498 = vmax.f32 %v438, 0.0
        %v499 = vmax.f32 %v441, 0.0
        %v500 = vmax.f32 %v443, 0.0
        %v501 = vmax.f32 %v446, 0.0
        %v502 = vmax.f32 %v448, 0.0
        %v503 = vmax.f32 %v451, 0.0
        %v504 = vmax.f32 %v453, 0.0
        %v505 = vmax.f32 %v456, 0.0
        %v506 = vmax.f32 %v458, 0.0
        %v507 = vmax.f32 %v461, 0.0
        %v508 = vmax.f32 %v463, 0.0
        %v509 = vmax.f32 %v466, 0.0
        %v510 = vmax.f32 %v468, 0.0
        %v511 = vmax.f32 %v471, 0.0
        %v512 = vmax.f32 %v473, 0.0
        %v513 = vmax.f32 %v476, 0.0
        %v514 = vmax.f32 %v478, 0.0
        %v515 = vmax.f32 %v481, 0.0
        %v516 = vmax.f32 %v483, 0.0
        %v517 = vpack.c.bf16 %v486, %v485
        %v518 = vpack.c.bf16 %v488, %v487
        %v519 = vpack.c.bf16 %v490, %v489
        %v520 = vpack.c.bf16 %v492, %v491
        %v521 = vpack.c.bf16 %v494, %v493
        %v522 = vpack.c.bf16 %v496, %v495
        %v523 = vpack.c.bf16 %v498, %v497
        %v524 = vpack.c.bf16 %v500, %v499
        %v525 = vpack.c.bf16 %v502, %v501
        %v526 = vpack.c.bf16 %v504, %v503
        %v527 = vpack.c.bf16 %v506, %v505
        %v528 = vpack.c.bf16 %v508, %v507
        %v529 = vpack.c.bf16 %v510, %v509
        %v530 = vpack.c.bf16 %v512, %v511
        %v531 = vpack.c.bf16 %v514, %v513
        %v532 = vpack.c.bf16 %v516, %v515
        %v533 = vld [vmem:[#allocation7] sm:$0xf]
        %v534 = vld [vmem:[#allocation7 + $0x4] sm:$0xf]
        %v535 = vld [vmem:[#allocation7 + $0x8] sm:$0xf]
        %v536 = vld [vmem:[#allocation7 + $0xc] sm:$0xf]
        %v537 = vld [vmem:[#allocation7 + $0x10] sm:$0xf]
        %v538 = vld [vmem:[#allocation7 + $0x14] sm:$0xf]
        %v539 = vld [vmem:[#allocation7 + $0x18] sm:$0xf]
        %v540 = vld [vmem:[#allocation7 + $0x1c] sm:$0xf]
        %v541 = vld [vmem:[#allocation7 + $0x20] sm:$0xf]
        %v542 = vld [vmem:[#allocation7 + $0x24] sm:$0xf]
        %v543 = vld [vmem:[#allocation7 + $0x28] sm:$0xf]
        %v544 = vld [vmem:[#allocation7 + $0x2c] sm:$0xf]
        %v545 = vld [vmem:[#allocation7 + $0x30] sm:$0xf]
        %v546 = vld [vmem:[#allocation7 + $0x34] sm:$0xf]
        %v547 = vld [vmem:[#allocation7 + $0x38] sm:$0xf]
        %v548 = vld [vmem:[#allocation7 + $0x3c] sm:$0xf]
        %v549 = vld [vmem:[%s4] sm:$0x1]
        %v551 = vperm.slane %v549, 0
        %v569 = vunpack.c.l.b16 %v533
        %v570 = vunpack.c.l.b16 %v534
        %v571 = vunpack.c.l.b16 %v535
        %v572 = vunpack.c.l.b16 %v536
        %v573 = vunpack.c.l.b16 %v537
        %v574 = vunpack.c.l.b16 %v538
        %v575 = vunpack.c.l.b16 %v539
        %v576 = vunpack.c.l.b16 %v540
        %v577 = vunpack.c.l.b16 %v541
        %v578 = vunpack.c.l.b16 %v542
        %v579 = vunpack.c.l.b16 %v543
        %v580 = vunpack.c.l.b16 %v544
        %v581 = vunpack.c.l.b16 %v545
        %v582 = vunpack.c.l.b16 %v546
        %v583 = vunpack.c.l.b16 %v547
        %v584 = vunpack.c.l.b16 %v548
        %v585 = vpack.c.b16 %v570, %v569
        %v586 = vpack.c.b16 %v572, %v571
        %v587 = vpack.c.b16 %v574, %v573
        %v588 = vpack.c.b16 %v576, %v575
        %v589 = vpack.c.b16 %v578, %v577
        %v590 = vpack.c.b16 %v580, %v579
        %v591 = vpack.c.b16 %v582, %v581
        %v592 = vpack.c.b16 %v584, %v583
        %601 = vmatpush.bf16.msra.mxu0 %v592
        %602 = vmatpush.bf16.msra.mxu0 %v591
        %603 = vmatpush.bf16.msra.mxu0 %v590
        %604 = vmatpush.bf16.msra.mxu0 %v589
        %605 = vmatpush.bf16.msra.mxu0 %v588
        %606 = vmatpush.bf16.msra.mxu0 %v587
        %607 = vmatpush.bf16.msra.mxu0 %v586
        %608 = vmatpush.bf16.msra.mxu0 %v585
        %609 = vmatmul.bf16.gmra.mxu0 %v517
        %v610 = vpop.f32.mrf.mxu0
        %v611 = vadd.f32 %v551, %v610
        %v612 = vpop.f32.mrf.mxu0
        %v613 = vadd.f32 %v551, %v612
        %614 = vmatmul.bf16.gmra.mxu0 %v518
        %v615 = vpop.f32.mrf.mxu0
        %v616 = vadd.f32 %v551, %v615
        %v617 = vpop.f32.mrf.mxu0
        %v618 = vadd.f32 %v551, %v617
        %619 = vmatmul.bf16.gmra.mxu0 %v519
        %v620 = vpop.f32.mrf.mxu0
        %v621 = vadd.f32 %v551, %v620
        %v622 = vpop.f32.mrf.mxu0
        %v623 = vadd.f32 %v551, %v622
        %624 = vmatmul.bf16.gmra.mxu0 %v520
        %v625 = vpop.f32.mrf.mxu0
        %v626 = vadd.f32 %v551, %v625
        %v627 = vpop.f32.mrf.mxu0
        %v628 = vadd.f32 %v551, %v627
        %629 = vmatmul.bf16.gmra.mxu0 %v521
        %v630 = vpop.f32.mrf.mxu0
        %v631 = vadd.f32 %v551, %v630
        %v632 = vpop.f32.mrf.mxu0
        %v633 = vadd.f32 %v551, %v632
        %634 = vmatmul.bf16.gmra.mxu0 %v522
        %v635 = vpop.f32.mrf.mxu0
        %v636 = vadd.f32 %v551, %v635
        %v637 = vpop.f32.mrf.mxu0
        %v638 = vadd.f32 %v551, %v637
        %639 = vmatmul.bf16.gmra.mxu0 %v523
        %v640 = vpop.f32.mrf.mxu0
        %v641 = vadd.f32 %v551, %v640
        %v642 = vpop.f32.mrf.mxu0
        %v643 = vadd.f32 %v551, %v642
        %644 = vmatmul.bf16.gmra.mxu0 %v524
        %v645 = vpop.f32.mrf.mxu0
        %v646 = vadd.f32 %v551, %v645
        %v647 = vpop.f32.mrf.mxu0
        %v648 = vadd.f32 %v551, %v647
        %649 = vmatmul.bf16.gmra.mxu0 %v525
        %v650 = vpop.f32.mrf.mxu0
        %v651 = vadd.f32 %v551, %v650
        %v652 = vpop.f32.mrf.mxu0
        %v653 = vadd.f32 %v551, %v652
        %654 = vmatmul.bf16.gmra.mxu0 %v526
        %v655 = vpop.f32.mrf.mxu0
        %v656 = vadd.f32 %v551, %v655
        %v657 = vpop.f32.mrf.mxu0
        %v658 = vadd.f32 %v551, %v657
        %659 = vmatmul.bf16.gmra.mxu0 %v527
        %v660 = vpop.f32.mrf.mxu0
        %v661 = vadd.f32 %v551, %v660
        %v662 = vpop.f32.mrf.mxu0
        %v663 = vadd.f32 %v551, %v662
        %664 = vmatmul.bf16.gmra.mxu0 %v528
        %v665 = vpop.f32.mrf.mxu0
        %v666 = vadd.f32 %v551, %v665
        %v667 = vpop.f32.mrf.mxu0
        %v668 = vadd.f32 %v551, %v667
        %669 = vmatmul.bf16.gmra.mxu0 %v529
        %v670 = vpop.f32.mrf.mxu0
        %v671 = vadd.f32 %v551, %v670
        %v672 = vpop.f32.mrf.mxu0
        %v673 = vadd.f32 %v551, %v672
        %674 = vmatmul.bf16.gmra.mxu0 %v530
        %v675 = vpop.f32.mrf.mxu0
        %v676 = vadd.f32 %v551, %v675
        %v677 = vpop.f32.mrf.mxu0
        %v678 = vadd.f32 %v551, %v677
        %679 = vmatmul.bf16.gmra.mxu0 %v531
        %v680 = vpop.f32.mrf.mxu0
        %v681 = vadd.f32 %v551, %v680
        %v682 = vpop.f32.mrf.mxu0
        %v683 = vadd.f32 %v551, %v682
        %684 = vmatmul.bf16.gmra.mxu0 %v532
        %v685 = vpop.f32.mrf.mxu0
        %v686 = vadd.f32 %v551, %v685
        %v687 = vpop.f32.mrf.mxu0
        %v688 = vadd.f32 %v551, %v687
        %689 = vdwg.mxu0
        %690 = vst [vmem:[%s277] sm:$0xff] %v611
        %691 = vst [vmem:[%s277 + $0x8] sm:$0xff] %v613
        %692 = vst [vmem:[%s277 + $0x10] sm:$0xff] %v616
        %693 = vst [vmem:[%s277 + $0x18] sm:$0xff] %v618
        %694 = vst [vmem:[%s277 + $0x20] sm:$0xff] %v621
        %695 = vst [vmem:[%s277 + $0x28] sm:$0xff] %v623
        %696 = vst [vmem:[%s277 + $0x30] sm:$0xff] %v626
        %697 = vst [vmem:[%s277 + $0x38] sm:$0xff] %v628
        %698 = vst [vmem:[%s277 + $0x40] sm:$0xff] %v631
        %699 = vst [vmem:[%s277 + $0x48] sm:$0xff] %v633
        %700 = vst [vmem:[%s277 + $0x50] sm:$0xff] %v636
        %701 = vst [vmem:[%s277 + $0x58] sm:$0xff] %v638
        %702 = vst [vmem:[%s277 + $0x60] sm:$0xff] %v641
        %703 = vst [vmem:[%s277 + $0x68] sm:$0xff] %v643
        %704 = vst [vmem:[%s277 + $0x70] sm:$0xff] %v646
        %705 = vst [vmem:[%s277 + $0x78] sm:$0xff] %v648
        %706 = vst [vmem:[%s277 + $0x80] sm:$0xff] %v651
        %707 = vst [vmem:[%s277 + $0x88] sm:$0xff] %v653
        %708 = vst [vmem:[%s277 + $0x90] sm:$0xff] %v656
        %709 = vst [vmem:[%s277 + $0x98] sm:$0xff] %v658
        %710 = vst [vmem:[%s277 + $0xa0] sm:$0xff] %v661
        %711 = vst [vmem:[%s277 + $0xa8] sm:$0xff] %v663
        %712 = vst [vmem:[%s277 + $0xb0] sm:$0xff] %v666
        %713 = vst [vmem:[%s277 + $0xb8] sm:$0xff] %v668
        %714 = vst [vmem:[%s277 + $0xc0] sm:$0xff] %v671
        %715 = vst [vmem:[%s277 + $0xc8] sm:$0xff] %v673
        %716 = vst [vmem:[%s277 + $0xd0] sm:$0xff] %v676
        %717 = vst [vmem:[%s277 + $0xd8] sm:$0xff] %v678
        %718 = vst [vmem:[%s277 + $0xe0] sm:$0xff] %v681
        %719 = vst [vmem:[%s277 + $0xe8] sm:$0xff] %v683
        %720 = vst [vmem:[%s277 + $0xf0] sm:$0xff] %v686
        %721 = vst [vmem:[%s277 + $0xf8] sm:$0xff] %v688
        %s722 = sand.u32 %s141, 1
        %s723 = scalar_lea.sflag [#allocation4], %s722
        %s724 = sand.u32 %s141, 1
        %s725 = smul.addr %s724, 256
        %s726 = scalar_lea.vmem [#allocation8], %s725
        // Predicated region
        $region53: #{softmax_approximator.1} parent=39 // pred_check
          %p727 = pneg %p151
        $region54: #{softmax_approximator.1} parent=39 // pred_check_branch
          %729 = sbr.rel (%p727) target = $region56
        $region55: #{softmax_approximator.1} parent=39 // pred_region
          %s730 = smul.u32 32, %s23
          %732 = vsyncadd %s723, 0
          %s733 = smul.addr %s730, 8
          %s734 = scalar_lea.hbm %s5, %s733
          %s735 = sshll.u32 %s726, 4
          %s736 = int_to_ptr.vmem [resolvable:$true] %s735
          %s737 = sshll.u32 %s734, 4
          %s738 = int_to_ptr.hbm [resolvable:$true] %s737
          %743 = dma.vmem_to_hbm [thread:$0]  %s736, 4096, %s738, %s723, 128, 128, 8
        $region56: #{softmax_approximator.1} parent=39 // pred_fallthru
          _
      $region40: #{softmax_approximator.1} parent=5 // pred_fallthru
        _
      %p744 = scmp.le.s32.totalorder 2, %s18
      // Predicated region
      $region57: #{softmax_approximator.1} parent=5 // pred_check
        %p745 = pneg %p744
      $region58: #{softmax_approximator.1} parent=5 // pred_check_branch
        %747 = sbr.rel (%p745) target = $region60
      $region59: #{softmax_approximator.1} parent=5 // pred_region
        %s748 = ssub.s32 %s18, 2
        // Predicated region
        $region61: #{softmax_approximator.1} parent=59 // pred_check
          %p749 = pneg %p157
        $region62: #{softmax_approximator.1} parent=59 // pred_check_branch
          %751 = sbr.rel (%p749) target = $region64
        $region63: #{softmax_approximator.1} parent=59 // pred_region
          %s752 = sand.u32 %s142, 1
          %s753 = scalar_lea.sflag [#allocation4], %s752
          %s754 = sand.u32 %s142, 1
          %s755 = smul.addr %s754, 256
          %s756 = scalar_lea.vmem [#allocation8], %s755
          %758 = dma.done %s753, 4096
        $region64: #{softmax_approximator.1} parent=59 // pred_fallthru
          _
      $region60: #{softmax_approximator.1} parent=5 // pred_fallthru
        _
    $region6: #{softmax_approximator.1} parent=1 // loop_footer
      %s22 = sadd.s32 1, %s18
    $region7: #{softmax_approximator.1} parent=1 // loop_footer_branch
      %17 = sbr.rel target = $region3
    $region8: #{softmax_approximator.1} parent=1 // loop_exit
      _
    %759 = vsyncpa [#allocation3], 1
    %s760 = scalar_lea.sflag [#allocation3], 1
    %761 = vsyncpa %s760, 1
    %762 = vsyncpa [#allocation6], 1
    %763 = vsyncpa [#allocation4], 1
    %s764 = scalar_lea.sflag [#allocation4], 1
    %765 = vsyncpa %s764, 1

</llo_original>
